<compile_context>
chip_gen: v6e
topology: v6e:2x2x1
jax: 0.10.0
libtpu: 0.0.40
codegen_flags: <defaults>
</compile_context>

<pallas_src>
import functools
import numpy as np
import jax
import jax.numpy as jnp
from jax import lax
from jax.experimental import pallas as pl
from jax.experimental.pallas import tpu as pltpu

TWO_PI = 2.0 * np.pi
LANE = 128


def _round_up(x, m):
    return ((x + m - 1) // m) * m


def _rotation_order(N):
    # Nullify U[p, q] for p = 0..N-2, q = N-1 .. p+1 (right to left).
    pq = [(i, N - 1 - j) for i in range(N - 1) for j in range(N - 1 - i)]
    p = np.array([a for a, _ in pq], dtype=np.int32)
    q = np.array([b for _, b in pq], dtype=np.int32)
    return p, q


# ----------------------------------------------------------------------------
# Pallas kernel: unitary reconstruction  U = diag(delta) @ R_M^T @ ... @ R_1^T
# Register-resident V, lane-packed batch (G = lane // N matrices per grid step).
# ----------------------------------------------------------------------------
def _reconstruct_kernel(c_ref, s_ref, delta_ref, o_ref, *, ab_pairs, n, valid_lanes):
    # c_ref, s_ref:  (m_pad, lane)   lane-packed cos/sin of quantized phases (rotation order)
    # delta_ref:     (row_pad, lane) lane-packed diagonal of the decomposition
    # o_ref:         (row_pad, lane) output tile (lane-dense, G matrices side by side)
    row_pad, lane = o_ref.shape

    # Register-resident V: one (1, lane) row per sublane; identity per packed matrix.
    col_ids = lax.broadcasted_iota(jnp.int32, (1, lane), 1)
    in_range = col_ids < valid_lanes
    rows = []
    for i in range(row_pad):
        if i < n:
            rows.append(jnp.where(((col_ids % n) == i) & in_range,
                                  1.0, 0.0).astype(jnp.float32))
        else:
            rows.append(jnp.zeros((1, lane), jnp.float32))

    # Unrolled static Givens chain: V <- R_k^T @ V  (only rows a=q-1, b=q change).
    # Rows live in vregs; only c/s need a (1, lane) VMEM row load per step.
    for k, (a, b) in enumerate(ab_pairs):
        ck = c_ref[k:k + 1, :]                 # (1, lane)
        sk = s_ref[k:k + 1, :]                 # (1, lane)
        ra = rows[a]
        rb = rows[b]
        rows[a] = ck * ra - sk * rb
        rows[b] = sk * ra + ck * rb

    # U = diag(delta) @ V  (row scale), single lane-dense store.
    v = jnp.concatenate(rows, axis=0)          # (row_pad, lane)
    o_ref[...] = delta_ref[...] * v


def reconstruct_pallas(c_packed, s_packed, delta_packed, *, ab_pairs, n, valid_lanes):
    # c_packed, s_packed: (n_groups, m_pad, lane); delta_packed: (n_groups, row_pad, lane)
    n_groups, m_pad, lane = c_packed.shape
    row_pad = delta_packed.shape[1]
    kern = functools.partial(_reconstruct_kernel, ab_pairs=ab_pairs, n=n,
                             valid_lanes=valid_lanes)
    return pl.pallas_call(
        kern,
        out_shape=jax.ShapeDtypeStruct((n_groups, row_pad, lane), jnp.float32),
        grid=(n_groups,),
        in_specs=[pl.BlockSpec((None, m_pad, lane), lambda g: (g, 0, 0)),
                  pl.BlockSpec((None, m_pad, lane), lambda g: (g, 0, 0)),
                  pl.BlockSpec((None, row_pad, lane), lambda g: (g, 0, 0))],
        out_specs=pl.BlockSpec((None, row_pad, lane), lambda g: (g, 0, 0)),
        compiler_params=pltpu.CompilerParams(
            dimension_semantics=("parallel",)),
    )(c_packed, s_packed, delta_packed)


# ----------------------------------------------------------------------------
# Plain-JAX glue: Reck decomposition (sequential, data-dependent)
# ----------------------------------------------------------------------------
def decompose_reck(U, min_err=1e-7):
    # U: (N, N) real orthogonal.  Returns delta_list (N,), phi_mat (N, N) strict upper.
    N = U.shape[-1]
    p_np, q_np = _rotation_order(N)
    n_rot = p_np.shape[0]
    p_j = jnp.asarray(p_np)
    q_j = jnp.asarray(q_np)

    def body(k, carry):
        Um, phi_mat = carry
        p = p_j[k]
        q = q_j[k]
        u1 = Um[p, q - 1]
        u2 = Um[p, q]
        both_small = (jnp.abs(u1) < min_err) & (jnp.abs(u2) < min_err)
        phi = jnp.where(both_small, 0.0, jnp.arctan2(-u2, u1))
        cc = jnp.cos(phi)
        ss = jnp.sin(phi)
        col_a = Um[:, q - 1]
        col_b = Um[:, q]
        Um = Um.at[:, q - 1].set(cc * col_a - ss * col_b)
        Um = Um.at[:, q].set(ss * col_a + cc * col_b)
        phi_mat = phi_mat.at[p, q].set(phi)
        return Um, phi_mat

    U_fin, phi_mat = lax.fori_loop(0, n_rot, body,
                                   (U, jnp.zeros((N, N), U.dtype)))
    delta = jnp.diagonal(U_fin)
    return delta, phi_mat


def unitary_quantizer_forward(x, bit):
    # x: (B, N, N) float32 orthogonal matrices
    B, N, _ = x.shape
    p_np, q_np = _rotation_order(N)
    M = len(p_np)
    lane = max(LANE, _round_up(N, LANE))
    G = lane // N                      # matrices packed along the lane axis per grid step
    n_groups = -(-B // G)
    B_pad = n_groups * G
    m_pad = _round_up(max(M, 1), 8)
    row_pad = _round_up(N, 8)
    valid_lanes = G * N

    # 1) Reck decomposition (data-dependent sequential Givens -> plain JAX glue)
    delta, phi_mat = jax.vmap(decompose_reck)(x)                        # (B, N), (B, N, N)

    # 2) m2v equivalent: phases gathered in rotation order (elementwise quantization is
    #    order-invariant, so triu-order vs rotation-order gives the same result).
    phis_rot = phi_mat[:, p_np, q_np]                                   # (B, M)

    # 3) PhaseQuantizer forward (rectangle mode): mod 2pi + round-to-grid, fused in XLA
    #    with the cos/sin glue (standalone Pallas quant kernel removed per perf review).
    ph = phis_rot - jnp.floor(phis_rot * (1.0 / TWO_PI)) * TWO_PI
    ratio = TWO_PI / (2.0 ** bit - 1.0)
    ph_q = jnp.round(ph * (1.0 / ratio)) * ratio

    # 4) cos/sin glue (tiny) + lane-packed layout:
    #    arr[grp, k, g*N + j] = value of matrix (grp*G + g), broadcast over j in [0, N).
    c = jnp.cos(ph_q)                                                   # (B, M)
    s = jnp.sin(ph_q)
    if B_pad > B:
        # padded slots: c=1, s=0, delta=1 -> they reconstruct the identity (trimmed later)
        c = jnp.concatenate([c, jnp.ones((B_pad - B, M), c.dtype)], axis=0)
        s = jnp.concatenate([s, jnp.zeros((B_pad - B, M), s.dtype)], axis=0)
        delta = jnp.concatenate([delta, jnp.ones((B_pad - B, N), delta.dtype)], axis=0)

    def lane_pack(v, width):
        # v: (B_pad, K) -> (n_groups, width, lane)
        K = v.shape[1]
        t = v.reshape(n_groups, G, K).transpose(0, 2, 1)                 # (n_groups, K, G)
        t = jnp.broadcast_to(t[..., None], (n_groups, K, G, N))
        t = t.reshape(n_groups, K, G * N)
        return jnp.pad(t, ((0, 0), (0, width - K), (0, lane - G * N)))

    c_packed = lane_pack(c, m_pad)                                       # (n_groups, m_pad, lane)
    s_packed = lane_pack(s, m_pad)
    delta_packed = lane_pack(delta, row_pad)                             # (n_groups, row_pad, lane)

    # 5) reconstruction (Pallas kernel: register-resident V, unrolled Givens chain)
    ab_pairs = tuple((int(q) - 1, int(q)) for q in q_np)
    out_packed = reconstruct_pallas(c_packed, s_packed, delta_packed,
                                    ab_pairs=ab_pairs, n=N, valid_lanes=valid_lanes)

    # unpack lanes -> (B, N, N)
    out = out_packed[:, :N, :G * N].reshape(n_groups, N, G, N)
    out = out.transpose(0, 2, 1, 3).reshape(B_pad, N, N)
    return out[:B]


# ----------------------------------------------------------------------------
# Pure-JAX reference for validation
# ----------------------------------------------------------------------------
def _ref_phase_quant(x, bit):
    x = x - jnp.floor(x * (1.0 / TWO_PI)) * TWO_PI
    ratio = TWO_PI / (2.0 ** bit - 1.0)
    return jnp.round(x * (1.0 / ratio)) * ratio


def _ref_forward(x, bit):
    # Independent reference: decompose -> m2v -> quantize -> v2m -> full NxN matmul chain.
    B, N, _ = x.shape
    p_np, q_np = _rotation_order(N)
    delta, phi_mat = jax.vmap(decompose_reck)(x)
    rows, cols = np.triu_indices(N, 1)
    vec = phi_mat[:, rows, cols]
    vec_q = _ref_phase_quant(vec, bit)
    phi_q = jnp.zeros((B, N, N), jnp.float32).at[:, rows, cols].set(vec_q)

    def recon_one(phm, d):
        V = jnp.eye(N, dtype=jnp.float32)
        for k in range(len(p_np)):
            p = int(p_np[k]); q = int(q_np[k]); a = q - 1; b = q
            phi = phm[p, q]
            cc = jnp.cos(phi); ss = jnp.sin(phi)
            R = (jnp.eye(N, dtype=jnp.float32)
                 .at[a, a].set(cc).at[a, b].set(-ss)
                 .at[b, a].set(ss).at[b, b].set(cc))
            V = jnp.matmul(R, V, precision=lax.Precision.HIGHEST)
        return d[:, None] * V

    return jax.vmap(recon_one)(phi_q, delta)


# ----------------------------------------------------------------------------
if __name__ == "__main__":
    key = jax.random.PRNGKey(0)
    B, N = 2, 8
    bit = 4

    g = jax.random.normal(key, (B, N, N), dtype=jnp.float32)
    q_mats, _ = jnp.linalg.qr(g)                 # deterministic orthogonal inputs
    x = q_mats.astype(jnp.float32)               # (B, N, N)

    fwd = jax.jit(lambda a: unitary_quantizer_forward(a, bit))
    out = jax.block_until_ready(fwd(x))

    # --- validation against pure-JAX reference ---
    ref = jax.jit(lambda a: _ref_forward(a, bit))(x)

    recon_err = float(jnp.max(jnp.abs(out - ref)))
    ortho_err = float(jnp.max(jnp.abs(
        jnp.einsum('bij,bkj->bik', out, out) - jnp.eye(N, dtype=jnp.float32))))

    ok = (out.shape == (B, N, N)
          and bool(jnp.all(jnp.isfinite(out)))
          and recon_err < 1e-3
          and ortho_err < 1e-3)

    if ok:
        print("KERNEL_OK")
    else:
        print(f"MISMATCH recon_err={recon_err} ortho_err={ortho_err}")
</pallas_src>

<mosaic_0001>
module attributes {stable_mosaic.version = 11 : i64} {
  func.func @_reconstruct_kernel(%arg0: i32, %arg1: memref<1x32x128xf32, #tpu.memory_space<vmem>>, %arg2: memref<1x32x128xf32, #tpu.memory_space<vmem>>, %arg3: memref<1x8x128xf32, #tpu.memory_space<vmem>>, %arg4: memref<1x8x128xf32, #tpu.memory_space<vmem>>) attributes {dimension_semantics = [#tpu.dimension_semantics<parallel>], iteration_bounds = array<i64: 1>, scalar_prefetch = 0 : i64, scratch_operands = 0 : i64, tpu.core_type = #tpu.core_type<tc>, window_params = [{transform_indices = @transform_0, window_bounds = array<i64: 1, 32, 128>}, {transform_indices = @transform_1, window_bounds = array<i64: 1, 32, 128>}, {transform_indices = @transform_2, window_bounds = array<i64: 1, 8, 128>}, {transform_indices = @transform_3, window_bounds = array<i64: 1, 8, 128>}]} {
    %0 = tpu.iota {dimensions = array<i32: 1>} : vector<1x128xi32>
    %c128_i32 = arith.constant 128 : i32
    %1 = vector.broadcast %c128_i32 : i32 to vector<1x128xi32>
    %2 = arith.cmpi slt, %0, %1 : vector<1x128xi32>
    %c8_i32 = arith.constant 8 : i32
    %c0_i32 = arith.constant 0 : i32
    %3 = arith.cmpi eq, %c8_i32, %c0_i32 : i32
    %c1_i32 = arith.constant 1 : i32
    %4 = arith.select %3, %c1_i32, %c8_i32 : i32
    %5 = vector.broadcast %4 : i32 to vector<1x128xi32>
    %6 = arith.remsi %0, %5 : vector<1x128xi32>
    %c0_i32_0 = arith.constant 0 : i32
    %7 = vector.broadcast %c0_i32_0 : i32 to vector<1x128xi32>
    %8 = arith.cmpi ne, %6, %7 : vector<1x128xi32>
    %c0_i32_1 = arith.constant 0 : i32
    %9 = vector.broadcast %c0_i32_1 : i32 to vector<1x128xi32>
    %10 = arith.cmpi slt, %6, %9 : vector<1x128xi32>
    %c0_i32_2 = arith.constant 0 : i32
    %11 = arith.cmpi slt, %4, %c0_i32_2 : i32
    %12 = vector.broadcast %11 : i1 to vector<1x128xi1>
    %13 = vector.broadcast %12 : vector<1x128xi1> to vector<1x128xi1>
    %14 = arith.xori %10, %13 : vector<1x128xi1>
    %15 = arith.andi %14, %8 : vector<1x128xi1>
    %16 = vector.broadcast %4 : i32 to vector<1x128xi32>
    %17 = arith.addi %6, %16 : vector<1x128xi32>
    %18 = arith.select %15, %17, %6 : vector<1x128xi1>, vector<1x128xi32>
    %c0_i32_3 = arith.constant 0 : i32
    %19 = vector.broadcast %c0_i32_3 : i32 to vector<1x128xi32>
    %20 = arith.cmpi eq, %18, %19 : vector<1x128xi32>
    %21 = arith.andi %20, %2 : vector<1x128xi1>
    %cst = arith.constant 1.000000e+00 : f32
    %cst_4 = arith.constant 0.000000e+00 : f32
    %22 = vector.broadcast %cst : f32 to vector<1x128xf32>
    %23 = vector.broadcast %cst_4 : f32 to vector<1x128xf32>
    %24 = arith.select %21, %22, %23 : vector<1x128xi1>, vector<1x128xf32>
    %c8_i32_5 = arith.constant 8 : i32
    %c0_i32_6 = arith.constant 0 : i32
    %25 = arith.cmpi eq, %c8_i32_5, %c0_i32_6 : i32
    %c1_i32_7 = arith.constant 1 : i32
    %26 = arith.select %25, %c1_i32_7, %c8_i32_5 : i32
    %27 = vector.broadcast %26 : i32 to vector<1x128xi32>
    %28 = arith.remsi %0, %27 : vector<1x128xi32>
    %c0_i32_8 = arith.constant 0 : i32
    %29 = vector.broadcast %c0_i32_8 : i32 to vector<1x128xi32>
    %30 = arith.cmpi ne, %28, %29 : vector<1x128xi32>
    %c0_i32_9 = arith.constant 0 : i32
    %31 = vector.broadcast %c0_i32_9 : i32 to vector<1x128xi32>
    %32 = arith.cmpi slt, %28, %31 : vector<1x128xi32>
    %c0_i32_10 = arith.constant 0 : i32
    %33 = arith.cmpi slt, %26, %c0_i32_10 : i32
    %34 = vector.broadcast %33 : i1 to vector<1x128xi1>
    %35 = vector.broadcast %34 : vector<1x128xi1> to vector<1x128xi1>
    %36 = arith.xori %32, %35 : vector<1x128xi1>
    %37 = arith.andi %36, %30 : vector<1x128xi1>
    %38 = vector.broadcast %26 : i32 to vector<1x128xi32>
    %39 = arith.addi %28, %38 : vector<1x128xi32>
    %40 = arith.select %37, %39, %28 : vector<1x128xi1>, vector<1x128xi32>
    %c1_i32_11 = arith.constant 1 : i32
    %41 = vector.broadcast %c1_i32_11 : i32 to vector<1x128xi32>
    %42 = arith.cmpi eq, %40, %41 : vector<1x128xi32>
    %43 = arith.andi %42, %2 : vector<1x128xi1>
    %cst_12 = arith.constant 1.000000e+00 : f32
    %cst_13 = arith.constant 0.000000e+00 : f32
    %44 = vector.broadcast %cst_12 : f32 to vector<1x128xf32>
    %45 = vector.broadcast %cst_13 : f32 to vector<1x128xf32>
    %46 = arith.select %43, %44, %45 : vector<1x128xi1>, vector<1x128xf32>
    %c8_i32_14 = arith.constant 8 : i32
    %c0_i32_15 = arith.constant 0 : i32
    %47 = arith.cmpi eq, %c8_i32_14, %c0_i32_15 : i32
    %c1_i32_16 = arith.constant 1 : i32
    %48 = arith.select %47, %c1_i32_16, %c8_i32_14 : i32
    %49 = vector.broadcast %48 : i32 to vector<1x128xi32>
    %50 = arith.remsi %0, %49 : vector<1x128xi32>
    %c0_i32_17 = arith.constant 0 : i32
    %51 = vector.broadcast %c0_i32_17 : i32 to vector<1x128xi32>
    %52 = arith.cmpi ne, %50, %51 : vector<1x128xi32>
    %c0_i32_18 = arith.constant 0 : i32
    %53 = vector.broadcast %c0_i32_18 : i32 to vector<1x128xi32>
    %54 = arith.cmpi slt, %50, %53 : vector<1x128xi32>
    %c0_i32_19 = arith.constant 0 : i32
    %55 = arith.cmpi slt, %48, %c0_i32_19 : i32
    %56 = vector.broadcast %55 : i1 to vector<1x128xi1>
    %57 = vector.broadcast %56 : vector<1x128xi1> to vector<1x128xi1>
    %58 = arith.xori %54, %57 : vector<1x128xi1>
    %59 = arith.andi %58, %52 : vector<1x128xi1>
    %60 = vector.broadcast %48 : i32 to vector<1x128xi32>
    %61 = arith.addi %50, %60 : vector<1x128xi32>
    %62 = arith.select %59, %61, %50 : vector<1x128xi1>, vector<1x128xi32>
    %c2_i32 = arith.constant 2 : i32
    %63 = vector.broadcast %c2_i32 : i32 to vector<1x128xi32>
    %64 = arith.cmpi eq, %62, %63 : vector<1x128xi32>
    %65 = arith.andi %64, %2 : vector<1x128xi1>
    %cst_20 = arith.constant 1.000000e+00 : f32
    %cst_21 = arith.constant 0.000000e+00 : f32
    %66 = vector.broadcast %cst_20 : f32 to vector<1x128xf32>
    %67 = vector.broadcast %cst_21 : f32 to vector<1x128xf32>
    %68 = arith.select %65, %66, %67 : vector<1x128xi1>, vector<1x128xf32>
    %c8_i32_22 = arith.constant 8 : i32
    %c0_i32_23 = arith.constant 0 : i32
    %69 = arith.cmpi eq, %c8_i32_22, %c0_i32_23 : i32
    %c1_i32_24 = arith.constant 1 : i32
    %70 = arith.select %69, %c1_i32_24, %c8_i32_22 : i32
    %71 = vector.broadcast %70 : i32 to vector<1x128xi32>
    %72 = arith.remsi %0, %71 : vector<1x128xi32>
    %c0_i32_25 = arith.constant 0 : i32
    %73 = vector.broadcast %c0_i32_25 : i32 to vector<1x128xi32>
    %74 = arith.cmpi ne, %72, %73 : vector<1x128xi32>
    %c0_i32_26 = arith.constant 0 : i32
    %75 = vector.broadcast %c0_i32_26 : i32 to vector<1x128xi32>
    %76 = arith.cmpi slt, %72, %75 : vector<1x128xi32>
    %c0_i32_27 = arith.constant 0 : i32
    %77 = arith.cmpi slt, %70, %c0_i32_27 : i32
    %78 = vector.broadcast %77 : i1 to vector<1x128xi1>
    %79 = vector.broadcast %78 : vector<1x128xi1> to vector<1x128xi1>
    %80 = arith.xori %76, %79 : vector<1x128xi1>
    %81 = arith.andi %80, %74 : vector<1x128xi1>
    %82 = vector.broadcast %70 : i32 to vector<1x128xi32>
    %83 = arith.addi %72, %82 : vector<1x128xi32>
    %84 = arith.select %81, %83, %72 : vector<1x128xi1>, vector<1x128xi32>
    %c3_i32 = arith.constant 3 : i32
    %85 = vector.broadcast %c3_i32 : i32 to vector<1x128xi32>
    %86 = arith.cmpi eq, %84, %85 : vector<1x128xi32>
    %87 = arith.andi %86, %2 : vector<1x128xi1>
    %cst_28 = arith.constant 1.000000e+00 : f32
    %cst_29 = arith.constant 0.000000e+00 : f32
    %88 = vector.broadcast %cst_28 : f32 to vector<1x128xf32>
    %89 = vector.broadcast %cst_29 : f32 to vector<1x128xf32>
    %90 = arith.select %87, %88, %89 : vector<1x128xi1>, vector<1x128xf32>
    %c8_i32_30 = arith.constant 8 : i32
    %c0_i32_31 = arith.constant 0 : i32
    %91 = arith.cmpi eq, %c8_i32_30, %c0_i32_31 : i32
    %c1_i32_32 = arith.constant 1 : i32
    %92 = arith.select %91, %c1_i32_32, %c8_i32_30 : i32
    %93 = vector.broadcast %92 : i32 to vector<1x128xi32>
    %94 = arith.remsi %0, %93 : vector<1x128xi32>
    %c0_i32_33 = arith.constant 0 : i32
    %95 = vector.broadcast %c0_i32_33 : i32 to vector<1x128xi32>
    %96 = arith.cmpi ne, %94, %95 : vector<1x128xi32>
    %c0_i32_34 = arith.constant 0 : i32
    %97 = vector.broadcast %c0_i32_34 : i32 to vector<1x128xi32>
    %98 = arith.cmpi slt, %94, %97 : vector<1x128xi32>
    %c0_i32_35 = arith.constant 0 : i32
    %99 = arith.cmpi slt, %92, %c0_i32_35 : i32
    %100 = vector.broadcast %99 : i1 to vector<1x128xi1>
    %101 = vector.broadcast %100 : vector<1x128xi1> to vector<1x128xi1>
    %102 = arith.xori %98, %101 : vector<1x128xi1>
    %103 = arith.andi %102, %96 : vector<1x128xi1>
    %104 = vector.broadcast %92 : i32 to vector<1x128xi32>
    %105 = arith.addi %94, %104 : vector<1x128xi32>
    %106 = arith.select %103, %105, %94 : vector<1x128xi1>, vector<1x128xi32>
    %c4_i32 = arith.constant 4 : i32
    %107 = vector.broadcast %c4_i32 : i32 to vector<1x128xi32>
    %108 = arith.cmpi eq, %106, %107 : vector<1x128xi32>
    %109 = arith.andi %108, %2 : vector<1x128xi1>
    %cst_36 = arith.constant 1.000000e+00 : f32
    %cst_37 = arith.constant 0.000000e+00 : f32
    %110 = vector.broadcast %cst_36 : f32 to vector<1x128xf32>
    %111 = vector.broadcast %cst_37 : f32 to vector<1x128xf32>
    %112 = arith.select %109, %110, %111 : vector<1x128xi1>, vector<1x128xf32>
    %c8_i32_38 = arith.constant 8 : i32
    %c0_i32_39 = arith.constant 0 : i32
    %113 = arith.cmpi eq, %c8_i32_38, %c0_i32_39 : i32
    %c1_i32_40 = arith.constant 1 : i32
    %114 = arith.select %113, %c1_i32_40, %c8_i32_38 : i32
    %115 = vector.broadcast %114 : i32 to vector<1x128xi32>
    %116 = arith.remsi %0, %115 : vector<1x128xi32>
    %c0_i32_41 = arith.constant 0 : i32
    %117 = vector.broadcast %c0_i32_41 : i32 to vector<1x128xi32>
    %118 = arith.cmpi ne, %116, %117 : vector<1x128xi32>
    %c0_i32_42 = arith.constant 0 : i32
    %119 = vector.broadcast %c0_i32_42 : i32 to vector<1x128xi32>
    %120 = arith.cmpi slt, %116, %119 : vector<1x128xi32>
    %c0_i32_43 = arith.constant 0 : i32
    %121 = arith.cmpi slt, %114, %c0_i32_43 : i32
    %122 = vector.broadcast %121 : i1 to vector<1x128xi1>
    %123 = vector.broadcast %122 : vector<1x128xi1> to vector<1x128xi1>
    %124 = arith.xori %120, %123 : vector<1x128xi1>
    %125 = arith.andi %124, %118 : vector<1x128xi1>
    %126 = vector.broadcast %114 : i32 to vector<1x128xi32>
    %127 = arith.addi %116, %126 : vector<1x128xi32>
    %128 = arith.select %125, %127, %116 : vector<1x128xi1>, vector<1x128xi32>
    %c5_i32 = arith.constant 5 : i32
    %129 = vector.broadcast %c5_i32 : i32 to vector<1x128xi32>
    %130 = arith.cmpi eq, %128, %129 : vector<1x128xi32>
    %131 = arith.andi %130, %2 : vector<1x128xi1>
    %cst_44 = arith.constant 1.000000e+00 : f32
    %cst_45 = arith.constant 0.000000e+00 : f32
    %132 = vector.broadcast %cst_44 : f32 to vector<1x128xf32>
    %133 = vector.broadcast %cst_45 : f32 to vector<1x128xf32>
    %134 = arith.select %131, %132, %133 : vector<1x128xi1>, vector<1x128xf32>
    %c8_i32_46 = arith.constant 8 : i32
    %c0_i32_47 = arith.constant 0 : i32
    %135 = arith.cmpi eq, %c8_i32_46, %c0_i32_47 : i32
    %c1_i32_48 = arith.constant 1 : i32
    %136 = arith.select %135, %c1_i32_48, %c8_i32_46 : i32
    %137 = vector.broadcast %136 : i32 to vector<1x128xi32>
    %138 = arith.remsi %0, %137 : vector<1x128xi32>
    %c0_i32_49 = arith.constant 0 : i32
    %139 = vector.broadcast %c0_i32_49 : i32 to vector<1x128xi32>
    %140 = arith.cmpi ne, %138, %139 : vector<1x128xi32>
    %c0_i32_50 = arith.constant 0 : i32
    %141 = vector.broadcast %c0_i32_50 : i32 to vector<1x128xi32>
    %142 = arith.cmpi slt, %138, %141 : vector<1x128xi32>
    %c0_i32_51 = arith.constant 0 : i32
    %143 = arith.cmpi slt, %136, %c0_i32_51 : i32
    %144 = vector.broadcast %143 : i1 to vector<1x128xi1>
    %145 = vector.broadcast %144 : vector<1x128xi1> to vector<1x128xi1>
    %146 = arith.xori %142, %145 : vector<1x128xi1>
    %147 = arith.andi %146, %140 : vector<1x128xi1>
    %148 = vector.broadcast %136 : i32 to vector<1x128xi32>
    %149 = arith.addi %138, %148 : vector<1x128xi32>
    %150 = arith.select %147, %149, %138 : vector<1x128xi1>, vector<1x128xi32>
    %c6_i32 = arith.constant 6 : i32
    %151 = vector.broadcast %c6_i32 : i32 to vector<1x128xi32>
    %152 = arith.cmpi eq, %150, %151 : vector<1x128xi32>
    %153 = arith.andi %152, %2 : vector<1x128xi1>
    %cst_52 = arith.constant 1.000000e+00 : f32
    %cst_53 = arith.constant 0.000000e+00 : f32
    %154 = vector.broadcast %cst_52 : f32 to vector<1x128xf32>
    %155 = vector.broadcast %cst_53 : f32 to vector<1x128xf32>
    %156 = arith.select %153, %154, %155 : vector<1x128xi1>, vector<1x128xf32>
    %c8_i32_54 = arith.constant 8 : i32
    %c0_i32_55 = arith.constant 0 : i32
    %157 = arith.cmpi eq, %c8_i32_54, %c0_i32_55 : i32
    %c1_i32_56 = arith.constant 1 : i32
    %158 = arith.select %157, %c1_i32_56, %c8_i32_54 : i32
    %159 = vector.broadcast %158 : i32 to vector<1x128xi32>
    %160 = arith.remsi %0, %159 : vector<1x128xi32>
    %c0_i32_57 = arith.constant 0 : i32
    %161 = vector.broadcast %c0_i32_57 : i32 to vector<1x128xi32>
    %162 = arith.cmpi ne, %160, %161 : vector<1x128xi32>
    %c0_i32_58 = arith.constant 0 : i32
    %163 = vector.broadcast %c0_i32_58 : i32 to vector<1x128xi32>
    %164 = arith.cmpi slt, %160, %163 : vector<1x128xi32>
    %c0_i32_59 = arith.constant 0 : i32
    %165 = arith.cmpi slt, %158, %c0_i32_59 : i32
    %166 = vector.broadcast %165 : i1 to vector<1x128xi1>
    %167 = vector.broadcast %166 : vector<1x128xi1> to vector<1x128xi1>
    %168 = arith.xori %164, %167 : vector<1x128xi1>
    %169 = arith.andi %168, %162 : vector<1x128xi1>
    %170 = vector.broadcast %158 : i32 to vector<1x128xi32>
    %171 = arith.addi %160, %170 : vector<1x128xi32>
    %172 = arith.select %169, %171, %160 : vector<1x128xi1>, vector<1x128xi32>
    %c7_i32 = arith.constant 7 : i32
    %173 = vector.broadcast %c7_i32 : i32 to vector<1x128xi32>
    %174 = arith.cmpi eq, %172, %173 : vector<1x128xi32>
    %175 = arith.andi %174, %2 : vector<1x128xi1>
    %cst_60 = arith.constant 1.000000e+00 : f32
    %cst_61 = arith.constant 0.000000e+00 : f32
    %176 = vector.broadcast %cst_60 : f32 to vector<1x128xf32>
    %177 = vector.broadcast %cst_61 : f32 to vector<1x128xf32>
    %178 = arith.select %175, %176, %177 : vector<1x128xi1>, vector<1x128xf32>
    %c0 = arith.constant 0 : index
    %c0_62 = arith.constant 0 : index
    %c0_63 = arith.constant 0 : index
    %179 = vector.load %arg1[%c0, %c0_62, %c0_63] : memref<1x32x128xf32, #tpu.memory_space<vmem>>, vector<1x1x128xf32>
    %180 = vector.shape_cast %179 : vector<1x1x128xf32> to vector<1x128xf32>
    %c0_64 = arith.constant 0 : index
    %c0_65 = arith.constant 0 : index
    %c0_66 = arith.constant 0 : index
    %181 = vector.load %arg2[%c0_64, %c0_65, %c0_66] : memref<1x32x128xf32, #tpu.memory_space<vmem>>, vector<1x1x128xf32>
    %182 = vector.shape_cast %181 : vector<1x1x128xf32> to vector<1x128xf32>
    %183 = arith.mulf %180, %156 : vector<1x128xf32>
    %184 = arith.mulf %182, %178 : vector<1x128xf32>
    %185 = arith.subf %183, %184 : vector<1x128xf32>
    %186 = arith.mulf %182, %156 : vector<1x128xf32>
    %187 = arith.mulf %180, %178 : vector<1x128xf32>
    %188 = arith.addf %186, %187 : vector<1x128xf32>
    %c0_67 = arith.constant 0 : index
    %c1 = arith.constant 1 : index
    %c0_68 = arith.constant 0 : index
    %189 = vector.load %arg1[%c0_67, %c1, %c0_68] : memref<1x32x128xf32, #tpu.memory_space<vmem>>, vector<1x1x128xf32>
    %190 = vector.shape_cast %189 : vector<1x1x128xf32> to vector<1x128xf32>
    %c0_69 = arith.constant 0 : index
    %c1_70 = arith.constant 1 : index
    %c0_71 = arith.constant 0 : index
    %191 = vector.load %arg2[%c0_69, %c1_70, %c0_71] : memref<1x32x128xf32, #tpu.memory_space<vmem>>, vector<1x1x128xf32>
    %192 = vector.shape_cast %191 : vector<1x1x128xf32> to vector<1x128xf32>
    %193 = arith.mulf %190, %134 : vector<1x128xf32>
    %194 = arith.mulf %192, %185 : vector<1x128xf32>
    %195 = arith.subf %193, %194 : vector<1x128xf32>
    %196 = arith.mulf %192, %134 : vector<1x128xf32>
    %197 = arith.mulf %190, %185 : vector<1x128xf32>
    %198 = arith.addf %196, %197 : vector<1x128xf32>
    %c0_72 = arith.constant 0 : index
    %c2 = arith.constant 2 : index
    %c0_73 = arith.constant 0 : index
    %199 = vector.load %arg1[%c0_72, %c2, %c0_73] : memref<1x32x128xf32, #tpu.memory_space<vmem>>, vector<1x1x128xf32>
    %200 = vector.shape_cast %199 : vector<1x1x128xf32> to vector<1x128xf32>
    %c0_74 = arith.constant 0 : index
    %c2_75 = arith.constant 2 : index
    %c0_76 = arith.constant 0 : index
    %201 = vector.load %arg2[%c0_74, %c2_75, %c0_76] : memref<1x32x128xf32, #tpu.memory_space<vmem>>, vector<1x1x128xf32>
    %202 = vector.shape_cast %201 : vector<1x1x128xf32> to vector<1x128xf32>
    %203 = arith.mulf %200, %112 : vector<1x128xf32>
    %204 = arith.mulf %202, %195 : vector<1x128xf32>
    %205 = arith.subf %203, %204 : vector<1x128xf32>
    %206 = arith.mulf %202, %112 : vector<1x128xf32>
    %207 = arith.mulf %200, %195 : vector<1x128xf32>
    %208 = arith.addf %206, %207 : vector<1x128xf32>
    %c0_77 = arith.constant 0 : index
    %c3 = arith.constant 3 : index
    %c0_78 = arith.constant 0 : index
    %209 = vector.load %arg1[%c0_77, %c3, %c0_78] : memref<1x32x128xf32, #tpu.memory_space<vmem>>, vector<1x1x128xf32>
    %210 = vector.shape_cast %209 : vector<1x1x128xf32> to vector<1x128xf32>
    %c0_79 = arith.constant 0 : index
    %c3_80 = arith.constant 3 : index
    %c0_81 = arith.constant 0 : index
    %211 = vector.load %arg2[%c0_79, %c3_80, %c0_81] : memref<1x32x128xf32, #tpu.memory_space<vmem>>, vector<1x1x128xf32>
    %212 = vector.shape_cast %211 : vector<1x1x128xf32> to vector<1x128xf32>
    %213 = arith.mulf %210, %90 : vector<1x128xf32>
    %214 = arith.mulf %212, %205 : vector<1x128xf32>
    %215 = arith.subf %213, %214 : vector<1x128xf32>
    %216 = arith.mulf %212, %90 : vector<1x128xf32>
    %217 = arith.mulf %210, %205 : vector<1x128xf32>
    %218 = arith.addf %216, %217 : vector<1x128xf32>
    %c0_82 = arith.constant 0 : index
    %c4 = arith.constant 4 : index
    %c0_83 = arith.constant 0 : index
    %219 = vector.load %arg1[%c0_82, %c4, %c0_83] : memref<1x32x128xf32, #tpu.memory_space<vmem>>, vector<1x1x128xf32>
    %220 = vector.shape_cast %219 : vector<1x1x128xf32> to vector<1x128xf32>
    %c0_84 = arith.constant 0 : index
    %c4_85 = arith.constant 4 : index
    %c0_86 = arith.constant 0 : index
    %221 = vector.load %arg2[%c0_84, %c4_85, %c0_86] : memref<1x32x128xf32, #tpu.memory_space<vmem>>, vector<1x1x128xf32>
    %222 = vector.shape_cast %221 : vector<1x1x128xf32> to vector<1x128xf32>
    %223 = arith.mulf %220, %68 : vector<1x128xf32>
    %224 = arith.mulf %222, %215 : vector<1x128xf32>
    %225 = arith.subf %223, %224 : vector<1x128xf32>
    %226 = arith.mulf %222, %68 : vector<1x128xf32>
    %227 = arith.mulf %220, %215 : vector<1x128xf32>
    %228 = arith.addf %226, %227 : vector<1x128xf32>
    %c0_87 = arith.constant 0 : index
    %c5 = arith.constant 5 : index
    %c0_88 = arith.constant 0 : index
    %229 = vector.load %arg1[%c0_87, %c5, %c0_88] : memref<1x32x128xf32, #tpu.memory_space<vmem>>, vector<1x1x128xf32>
    %230 = vector.shape_cast %229 : vector<1x1x128xf32> to vector<1x128xf32>
    %c0_89 = arith.constant 0 : index
    %c5_90 = arith.constant 5 : index
    %c0_91 = arith.constant 0 : index
    %231 = vector.load %arg2[%c0_89, %c5_90, %c0_91] : memref<1x32x128xf32, #tpu.memory_space<vmem>>, vector<1x1x128xf32>
    %232 = vector.shape_cast %231 : vector<1x1x128xf32> to vector<1x128xf32>
    %233 = arith.mulf %230, %46 : vector<1x128xf32>
    %234 = arith.mulf %232, %225 : vector<1x128xf32>
    %235 = arith.subf %233, %234 : vector<1x128xf32>
    %236 = arith.mulf %232, %46 : vector<1x128xf32>
    %237 = arith.mulf %230, %225 : vector<1x128xf32>
    %238 = arith.addf %236, %237 : vector<1x128xf32>
    %c0_92 = arith.constant 0 : index
    %c6 = arith.constant 6 : index
    %c0_93 = arith.constant 0 : index
    %239 = vector.load %arg1[%c0_92, %c6, %c0_93] : memref<1x32x128xf32, #tpu.memory_space<vmem>>, vector<1x1x128xf32>
    %240 = vector.shape_cast %239 : vector<1x1x128xf32> to vector<1x128xf32>
    %c0_94 = arith.constant 0 : index
    %c6_95 = arith.constant 6 : index
    %c0_96 = arith.constant 0 : index
    %241 = vector.load %arg2[%c0_94, %c6_95, %c0_96] : memref<1x32x128xf32, #tpu.memory_space<vmem>>, vector<1x1x128xf32>
    %242 = vector.shape_cast %241 : vector<1x1x128xf32> to vector<1x128xf32>
    %243 = arith.mulf %240, %24 : vector<1x128xf32>
    %244 = arith.mulf %242, %235 : vector<1x128xf32>
    %245 = arith.subf %243, %244 : vector<1x128xf32>
    %246 = arith.mulf %242, %24 : vector<1x128xf32>
    %247 = arith.mulf %240, %235 : vector<1x128xf32>
    %248 = arith.addf %246, %247 : vector<1x128xf32>
    %c0_97 = arith.constant 0 : index
    %c7 = arith.constant 7 : index
    %c0_98 = arith.constant 0 : index
    %249 = vector.load %arg1[%c0_97, %c7, %c0_98] : memref<1x32x128xf32, #tpu.memory_space<vmem>>, vector<1x1x128xf32>
    %250 = vector.shape_cast %249 : vector<1x1x128xf32> to vector<1x128xf32>
    %c0_99 = arith.constant 0 : index
    %c7_100 = arith.constant 7 : index
    %c0_101 = arith.constant 0 : index
    %251 = vector.load %arg2[%c0_99, %c7_100, %c0_101] : memref<1x32x128xf32, #tpu.memory_space<vmem>>, vector<1x1x128xf32>
    %252 = vector.shape_cast %251 : vector<1x1x128xf32> to vector<1x128xf32>
    %253 = arith.mulf %250, %198 : vector<1x128xf32>
    %254 = arith.mulf %252, %188 : vector<1x128xf32>
    %255 = arith.subf %253, %254 : vector<1x128xf32>
    %256 = arith.mulf %252, %198 : vector<1x128xf32>
    %257 = arith.mulf %250, %188 : vector<1x128xf32>
    %258 = arith.addf %256, %257 : vector<1x128xf32>
    %c0_102 = arith.constant 0 : index
    %c8 = arith.constant 8 : index
    %c0_103 = arith.constant 0 : index
    %259 = vector.load %arg1[%c0_102, %c8, %c0_103] : memref<1x32x128xf32, #tpu.memory_space<vmem>>, vector<1x1x128xf32>
    %260 = vector.shape_cast %259 : vector<1x1x128xf32> to vector<1x128xf32>
    %c0_104 = arith.constant 0 : index
    %c8_105 = arith.constant 8 : index
    %c0_106 = arith.constant 0 : index
    %261 = vector.load %arg2[%c0_104, %c8_105, %c0_106] : memref<1x32x128xf32, #tpu.memory_space<vmem>>, vector<1x1x128xf32>
    %262 = vector.shape_cast %261 : vector<1x1x128xf32> to vector<1x128xf32>
    %263 = arith.mulf %260, %208 : vector<1x128xf32>
    %264 = arith.mulf %262, %255 : vector<1x128xf32>
    %265 = arith.subf %263, %264 : vector<1x128xf32>
    %266 = arith.mulf %262, %208 : vector<1x128xf32>
    %267 = arith.mulf %260, %255 : vector<1x128xf32>
    %268 = arith.addf %266, %267 : vector<1x128xf32>
    %c0_107 = arith.constant 0 : index
    %c9 = arith.constant 9 : index
    %c0_108 = arith.constant 0 : index
    %269 = vector.load %arg1[%c0_107, %c9, %c0_108] : memref<1x32x128xf32, #tpu.memory_space<vmem>>, vector<1x1x128xf32>
    %270 = vector.shape_cast %269 : vector<1x1x128xf32> to vector<1x128xf32>
    %c0_109 = arith.constant 0 : index
    %c9_110 = arith.constant 9 : index
    %c0_111 = arith.constant 0 : index
    %271 = vector.load %arg2[%c0_109, %c9_110, %c0_111] : memref<1x32x128xf32, #tpu.memory_space<vmem>>, vector<1x1x128xf32>
    %272 = vector.shape_cast %271 : vector<1x1x128xf32> to vector<1x128xf32>
    %273 = arith.mulf %270, %218 : vector<1x128xf32>
    %274 = arith.mulf %272, %265 : vector<1x128xf32>
    %275 = arith.subf %273, %274 : vector<1x128xf32>
    %276 = arith.mulf %272, %218 : vector<1x128xf32>
    %277 = arith.mulf %270, %265 : vector<1x128xf32>
    %278 = arith.addf %276, %277 : vector<1x128xf32>
    %c0_112 = arith.constant 0 : index
    %c10 = arith.constant 10 : index
    %c0_113 = arith.constant 0 : index
    %279 = vector.load %arg1[%c0_112, %c10, %c0_113] : memref<1x32x128xf32, #tpu.memory_space<vmem>>, vector<1x1x128xf32>
    %280 = vector.shape_cast %279 : vector<1x1x128xf32> to vector<1x128xf32>
    %c0_114 = arith.constant 0 : index
    %c10_115 = arith.constant 10 : index
    %c0_116 = arith.constant 0 : index
    %281 = vector.load %arg2[%c0_114, %c10_115, %c0_116] : memref<1x32x128xf32, #tpu.memory_space<vmem>>, vector<1x1x128xf32>
    %282 = vector.shape_cast %281 : vector<1x1x128xf32> to vector<1x128xf32>
    %283 = arith.mulf %280, %228 : vector<1x128xf32>
    %284 = arith.mulf %282, %275 : vector<1x128xf32>
    %285 = arith.subf %283, %284 : vector<1x128xf32>
    %286 = arith.mulf %282, %228 : vector<1x128xf32>
    %287 = arith.mulf %280, %275 : vector<1x128xf32>
    %288 = arith.addf %286, %287 : vector<1x128xf32>
    %c0_117 = arith.constant 0 : index
    %c11 = arith.constant 11 : index
    %c0_118 = arith.constant 0 : index
    %289 = vector.load %arg1[%c0_117, %c11, %c0_118] : memref<1x32x128xf32, #tpu.memory_space<vmem>>, vector<1x1x128xf32>
    %290 = vector.shape_cast %289 : vector<1x1x128xf32> to vector<1x128xf32>
    %c0_119 = arith.constant 0 : index
    %c11_120 = arith.constant 11 : index
    %c0_121 = arith.constant 0 : index
    %291 = vector.load %arg2[%c0_119, %c11_120, %c0_121] : memref<1x32x128xf32, #tpu.memory_space<vmem>>, vector<1x1x128xf32>
    %292 = vector.shape_cast %291 : vector<1x1x128xf32> to vector<1x128xf32>
    %293 = arith.mulf %290, %238 : vector<1x128xf32>
    %294 = arith.mulf %292, %285 : vector<1x128xf32>
    %295 = arith.subf %293, %294 : vector<1x128xf32>
    %296 = arith.mulf %292, %238 : vector<1x128xf32>
    %297 = arith.mulf %290, %285 : vector<1x128xf32>
    %298 = arith.addf %296, %297 : vector<1x128xf32>
    %c0_122 = arith.constant 0 : index
    %c12 = arith.constant 12 : index
    %c0_123 = arith.constant 0 : index
    %299 = vector.load %arg1[%c0_122, %c12, %c0_123] : memref<1x32x128xf32, #tpu.memory_space<vmem>>, vector<1x1x128xf32>
    %300 = vector.shape_cast %299 : vector<1x1x128xf32> to vector<1x128xf32>
    %c0_124 = arith.constant 0 : index
    %c12_125 = arith.constant 12 : index
    %c0_126 = arith.constant 0 : index
    %301 = vector.load %arg2[%c0_124, %c12_125, %c0_126] : memref<1x32x128xf32, #tpu.memory_space<vmem>>, vector<1x1x128xf32>
    %302 = vector.shape_cast %301 : vector<1x1x128xf32> to vector<1x128xf32>
    %303 = arith.mulf %300, %248 : vector<1x128xf32>
    %304 = arith.mulf %302, %295 : vector<1x128xf32>
    %305 = arith.subf %303, %304 : vector<1x128xf32>
    %306 = arith.mulf %302, %248 : vector<1x128xf32>
    %307 = arith.mulf %300, %295 : vector<1x128xf32>
    %308 = arith.addf %306, %307 : vector<1x128xf32>
    %c0_127 = arith.constant 0 : index
    %c13 = arith.constant 13 : index
    %c0_128 = arith.constant 0 : index
    %309 = vector.load %arg1[%c0_127, %c13, %c0_128] : memref<1x32x128xf32, #tpu.memory_space<vmem>>, vector<1x1x128xf32>
    %310 = vector.shape_cast %309 : vector<1x1x128xf32> to vector<1x128xf32>
    %c0_129 = arith.constant 0 : index
    %c13_130 = arith.constant 13 : index
    %c0_131 = arith.constant 0 : index
    %311 = vector.load %arg2[%c0_129, %c13_130, %c0_131] : memref<1x32x128xf32, #tpu.memory_space<vmem>>, vector<1x1x128xf32>
    %312 = vector.shape_cast %311 : vector<1x1x128xf32> to vector<1x128xf32>
    %313 = arith.mulf %310, %268 : vector<1x128xf32>
    %314 = arith.mulf %312, %258 : vector<1x128xf32>
    %315 = arith.subf %313, %314 : vector<1x128xf32>
    %316 = arith.mulf %312, %268 : vector<1x128xf32>
    %317 = arith.mulf %310, %258 : vector<1x128xf32>
    %318 = arith.addf %316, %317 : vector<1x128xf32>
    %c0_132 = arith.constant 0 : index
    %c14 = arith.constant 14 : index
    %c0_133 = arith.constant 0 : index
    %319 = vector.load %arg1[%c0_132, %c14, %c0_133] : memref<1x32x128xf32, #tpu.memory_space<vmem>>, vector<1x1x128xf32>
    %320 = vector.shape_cast %319 : vector<1x1x128xf32> to vector<1x128xf32>
    %c0_134 = arith.constant 0 : index
    %c14_135 = arith.constant 14 : index
    %c0_136 = arith.constant 0 : index
    %321 = vector.load %arg2[%c0_134, %c14_135, %c0_136] : memref<1x32x128xf32, #tpu.memory_space<vmem>>, vector<1x1x128xf32>
    %322 = vector.shape_cast %321 : vector<1x1x128xf32> to vector<1x128xf32>
    %323 = arith.mulf %320, %278 : vector<1x128xf32>
    %324 = arith.mulf %322, %315 : vector<1x128xf32>
    %325 = arith.subf %323, %324 : vector<1x128xf32>
    %326 = arith.mulf %322, %278 : vector<1x128xf32>
    %327 = arith.mulf %320, %315 : vector<1x128xf32>
    %328 = arith.addf %326, %327 : vector<1x128xf32>
    %c0_137 = arith.constant 0 : index
    %c15 = arith.constant 15 : index
    %c0_138 = arith.constant 0 : index
    %329 = vector.load %arg1[%c0_137, %c15, %c0_138] : memref<1x32x128xf32, #tpu.memory_space<vmem>>, vector<1x1x128xf32>
    %330 = vector.shape_cast %329 : vector<1x1x128xf32> to vector<1x128xf32>
    %c0_139 = arith.constant 0 : index
    %c15_140 = arith.constant 15 : index
    %c0_141 = arith.constant 0 : index
    %331 = vector.load %arg2[%c0_139, %c15_140, %c0_141] : memref<1x32x128xf32, #tpu.memory_space<vmem>>, vector<1x1x128xf32>
    %332 = vector.shape_cast %331 : vector<1x1x128xf32> to vector<1x128xf32>
    %333 = arith.mulf %330, %288 : vector<1x128xf32>
    %334 = arith.mulf %332, %325 : vector<1x128xf32>
    %335 = arith.subf %333, %334 : vector<1x128xf32>
    %336 = arith.mulf %332, %288 : vector<1x128xf32>
    %337 = arith.mulf %330, %325 : vector<1x128xf32>
    %338 = arith.addf %336, %337 : vector<1x128xf32>
    %c0_142 = arith.constant 0 : index
    %c16 = arith.constant 16 : index
    %c0_143 = arith.constant 0 : index
    %339 = vector.load %arg1[%c0_142, %c16, %c0_143] : memref<1x32x128xf32, #tpu.memory_space<vmem>>, vector<1x1x128xf32>
    %340 = vector.shape_cast %339 : vector<1x1x128xf32> to vector<1x128xf32>
    %c0_144 = arith.constant 0 : index
    %c16_145 = arith.constant 16 : index
    %c0_146 = arith.constant 0 : index
    %341 = vector.load %arg2[%c0_144, %c16_145, %c0_146] : memref<1x32x128xf32, #tpu.memory_space<vmem>>, vector<1x1x128xf32>
    %342 = vector.shape_cast %341 : vector<1x1x128xf32> to vector<1x128xf32>
    %343 = arith.mulf %340, %298 : vector<1x128xf32>
    %344 = arith.mulf %342, %335 : vector<1x128xf32>
    %345 = arith.subf %343, %344 : vector<1x128xf32>
    %346 = arith.mulf %342, %298 : vector<1x128xf32>
    %347 = arith.mulf %340, %335 : vector<1x128xf32>
    %348 = arith.addf %346, %347 : vector<1x128xf32>
    %c0_147 = arith.constant 0 : index
    %c17 = arith.constant 17 : index
    %c0_148 = arith.constant 0 : index
    %349 = vector.load %arg1[%c0_147, %c17, %c0_148] : memref<1x32x128xf32, #tpu.memory_space<vmem>>, vector<1x1x128xf32>
    %350 = vector.shape_cast %349 : vector<1x1x128xf32> to vector<1x128xf32>
    %c0_149 = arith.constant 0 : index
    %c17_150 = arith.constant 17 : index
    %c0_151 = arith.constant 0 : index
    %351 = vector.load %arg2[%c0_149, %c17_150, %c0_151] : memref<1x32x128xf32, #tpu.memory_space<vmem>>, vector<1x1x128xf32>
    %352 = vector.shape_cast %351 : vector<1x1x128xf32> to vector<1x128xf32>
    %353 = arith.mulf %350, %308 : vector<1x128xf32>
    %354 = arith.mulf %352, %345 : vector<1x128xf32>
    %355 = arith.subf %353, %354 : vector<1x128xf32>
    %356 = arith.mulf %352, %308 : vector<1x128xf32>
    %357 = arith.mulf %350, %345 : vector<1x128xf32>
    %358 = arith.addf %356, %357 : vector<1x128xf32>
    %c0_152 = arith.constant 0 : index
    %c18 = arith.constant 18 : index
    %c0_153 = arith.constant 0 : index
    %359 = vector.load %arg1[%c0_152, %c18, %c0_153] : memref<1x32x128xf32, #tpu.memory_space<vmem>>, vector<1x1x128xf32>
    %360 = vector.shape_cast %359 : vector<1x1x128xf32> to vector<1x128xf32>
    %c0_154 = arith.constant 0 : index
    %c18_155 = arith.constant 18 : index
    %c0_156 = arith.constant 0 : index
    %361 = vector.load %arg2[%c0_154, %c18_155, %c0_156] : memref<1x32x128xf32, #tpu.memory_space<vmem>>, vector<1x1x128xf32>
    %362 = vector.shape_cast %361 : vector<1x1x128xf32> to vector<1x128xf32>
    %363 = arith.mulf %360, %328 : vector<1x128xf32>
    %364 = arith.mulf %362, %318 : vector<1x128xf32>
    %365 = arith.subf %363, %364 : vector<1x128xf32>
    %366 = arith.mulf %362, %328 : vector<1x128xf32>
    %367 = arith.mulf %360, %318 : vector<1x128xf32>
    %368 = arith.addf %366, %367 : vector<1x128xf32>
    %c0_157 = arith.constant 0 : index
    %c19 = arith.constant 19 : index
    %c0_158 = arith.constant 0 : index
    %369 = vector.load %arg1[%c0_157, %c19, %c0_158] : memref<1x32x128xf32, #tpu.memory_space<vmem>>, vector<1x1x128xf32>
    %370 = vector.shape_cast %369 : vector<1x1x128xf32> to vector<1x128xf32>
    %c0_159 = arith.constant 0 : index
    %c19_160 = arith.constant 19 : index
    %c0_161 = arith.constant 0 : index
    %371 = vector.load %arg2[%c0_159, %c19_160, %c0_161] : memref<1x32x128xf32, #tpu.memory_space<vmem>>, vector<1x1x128xf32>
    %372 = vector.shape_cast %371 : vector<1x1x128xf32> to vector<1x128xf32>
    %373 = arith.mulf %370, %338 : vector<1x128xf32>
    %374 = arith.mulf %372, %365 : vector<1x128xf32>
    %375 = arith.subf %373, %374 : vector<1x128xf32>
    %376 = arith.mulf %372, %338 : vector<1x128xf32>
    %377 = arith.mulf %370, %365 : vector<1x128xf32>
    %378 = arith.addf %376, %377 : vector<1x128xf32>
    %c0_162 = arith.constant 0 : index
    %c20 = arith.constant 20 : index
    %c0_163 = arith.constant 0 : index
    %379 = vector.load %arg1[%c0_162, %c20, %c0_163] : memref<1x32x128xf32, #tpu.memory_space<vmem>>, vector<1x1x128xf32>
    %380 = vector.shape_cast %379 : vector<1x1x128xf32> to vector<1x128xf32>
    %c0_164 = arith.constant 0 : index
    %c20_165 = arith.constant 20 : index
    %c0_166 = arith.constant 0 : index
    %381 = vector.load %arg2[%c0_164, %c20_165, %c0_166] : memref<1x32x128xf32, #tpu.memory_space<vmem>>, vector<1x1x128xf32>
    %382 = vector.shape_cast %381 : vector<1x1x128xf32> to vector<1x128xf32>
    %383 = arith.mulf %380, %348 : vector<1x128xf32>
    %384 = arith.mulf %382, %375 : vector<1x128xf32>
    %385 = arith.subf %383, %384 : vector<1x128xf32>
    %386 = arith.mulf %382, %348 : vector<1x128xf32>
    %387 = arith.mulf %380, %375 : vector<1x128xf32>
    %388 = arith.addf %386, %387 : vector<1x128xf32>
    %c0_167 = arith.constant 0 : index
    %c21 = arith.constant 21 : index
    %c0_168 = arith.constant 0 : index
    %389 = vector.load %arg1[%c0_167, %c21, %c0_168] : memref<1x32x128xf32, #tpu.memory_space<vmem>>, vector<1x1x128xf32>
    %390 = vector.shape_cast %389 : vector<1x1x128xf32> to vector<1x128xf32>
    %c0_169 = arith.constant 0 : index
    %c21_170 = arith.constant 21 : index
    %c0_171 = arith.constant 0 : index
    %391 = vector.load %arg2[%c0_169, %c21_170, %c0_171] : memref<1x32x128xf32, #tpu.memory_space<vmem>>, vector<1x1x128xf32>
    %392 = vector.shape_cast %391 : vector<1x1x128xf32> to vector<1x128xf32>
    %393 = arith.mulf %390, %358 : vector<1x128xf32>
    %394 = arith.mulf %392, %385 : vector<1x128xf32>
    %395 = arith.subf %393, %394 : vector<1x128xf32>
    %396 = arith.mulf %392, %358 : vector<1x128xf32>
    %397 = arith.mulf %390, %385 : vector<1x128xf32>
    %398 = arith.addf %396, %397 : vector<1x128xf32>
    %c0_172 = arith.constant 0 : index
    %c22 = arith.constant 22 : index
    %c0_173 = arith.constant 0 : index
    %399 = vector.load %arg1[%c0_172, %c22, %c0_173] : memref<1x32x128xf32, #tpu.memory_space<vmem>>, vector<1x1x128xf32>
    %400 = vector.shape_cast %399 : vector<1x1x128xf32> to vector<1x128xf32>
    %c0_174 = arith.constant 0 : index
    %c22_175 = arith.constant 22 : index
    %c0_176 = arith.constant 0 : index
    %401 = vector.load %arg2[%c0_174, %c22_175, %c0_176] : memref<1x32x128xf32, #tpu.memory_space<vmem>>, vector<1x1x128xf32>
    %402 = vector.shape_cast %401 : vector<1x1x128xf32> to vector<1x128xf32>
    %403 = arith.mulf %400, %378 : vector<1x128xf32>
    %404 = arith.mulf %402, %368 : vector<1x128xf32>
    %405 = arith.subf %403, %404 : vector<1x128xf32>
    %406 = arith.mulf %402, %378 : vector<1x128xf32>
    %407 = arith.mulf %400, %368 : vector<1x128xf32>
    %408 = arith.addf %406, %407 : vector<1x128xf32>
    %c0_177 = arith.constant 0 : index
    %c23 = arith.constant 23 : index
    %c0_178 = arith.constant 0 : index
    %409 = vector.load %arg1[%c0_177, %c23, %c0_178] : memref<1x32x128xf32, #tpu.memory_space<vmem>>, vector<1x1x128xf32>
    %410 = vector.shape_cast %409 : vector<1x1x128xf32> to vector<1x128xf32>
    %c0_179 = arith.constant 0 : index
    %c23_180 = arith.constant 23 : index
    %c0_181 = arith.constant 0 : index
    %411 = vector.load %arg2[%c0_179, %c23_180, %c0_181] : memref<1x32x128xf32, #tpu.memory_space<vmem>>, vector<1x1x128xf32>
    %412 = vector.shape_cast %411 : vector<1x1x128xf32> to vector<1x128xf32>
    %413 = arith.mulf %410, %388 : vector<1x128xf32>
    %414 = arith.mulf %412, %405 : vector<1x128xf32>
    %415 = arith.subf %413, %414 : vector<1x128xf32>
    %416 = arith.mulf %412, %388 : vector<1x128xf32>
    %417 = arith.mulf %410, %405 : vector<1x128xf32>
    %418 = arith.addf %416, %417 : vector<1x128xf32>
    %c0_182 = arith.constant 0 : index
    %c24 = arith.constant 24 : index
    %c0_183 = arith.constant 0 : index
    %419 = vector.load %arg1[%c0_182, %c24, %c0_183] : memref<1x32x128xf32, #tpu.memory_space<vmem>>, vector<1x1x128xf32>
    %420 = vector.shape_cast %419 : vector<1x1x128xf32> to vector<1x128xf32>
    %c0_184 = arith.constant 0 : index
    %c24_185 = arith.constant 24 : index
    %c0_186 = arith.constant 0 : index
    %421 = vector.load %arg2[%c0_184, %c24_185, %c0_186] : memref<1x32x128xf32, #tpu.memory_space<vmem>>, vector<1x1x128xf32>
    %422 = vector.shape_cast %421 : vector<1x1x128xf32> to vector<1x128xf32>
    %423 = arith.mulf %420, %398 : vector<1x128xf32>
    %424 = arith.mulf %422, %415 : vector<1x128xf32>
    %425 = arith.subf %423, %424 : vector<1x128xf32>
    %426 = arith.mulf %422, %398 : vector<1x128xf32>
    %427 = arith.mulf %420, %415 : vector<1x128xf32>
    %428 = arith.addf %426, %427 : vector<1x128xf32>
    %c0_187 = arith.constant 0 : index
    %c25 = arith.constant 25 : index
    %c0_188 = arith.constant 0 : index
    %429 = vector.load %arg1[%c0_187, %c25, %c0_188] : memref<1x32x128xf32, #tpu.memory_space<vmem>>, vector<1x1x128xf32>
    %430 = vector.shape_cast %429 : vector<1x1x128xf32> to vector<1x128xf32>
    %c0_189 = arith.constant 0 : index
    %c25_190 = arith.constant 25 : index
    %c0_191 = arith.constant 0 : index
    %431 = vector.load %arg2[%c0_189, %c25_190, %c0_191] : memref<1x32x128xf32, #tpu.memory_space<vmem>>, vector<1x1x128xf32>
    %432 = vector.shape_cast %431 : vector<1x1x128xf32> to vector<1x128xf32>
    %433 = arith.mulf %430, %418 : vector<1x128xf32>
    %434 = arith.mulf %432, %408 : vector<1x128xf32>
    %435 = arith.subf %433, %434 : vector<1x128xf32>
    %436 = arith.mulf %432, %418 : vector<1x128xf32>
    %437 = arith.mulf %430, %408 : vector<1x128xf32>
    %438 = arith.addf %436, %437 : vector<1x128xf32>
    %c0_192 = arith.constant 0 : index
    %c26 = arith.constant 26 : index
    %c0_193 = arith.constant 0 : index
    %439 = vector.load %arg1[%c0_192, %c26, %c0_193] : memref<1x32x128xf32, #tpu.memory_space<vmem>>, vector<1x1x128xf32>
    %440 = vector.shape_cast %439 : vector<1x1x128xf32> to vector<1x128xf32>
    %c0_194 = arith.constant 0 : index
    %c26_195 = arith.constant 26 : index
    %c0_196 = arith.constant 0 : index
    %441 = vector.load %arg2[%c0_194, %c26_195, %c0_196] : memref<1x32x128xf32, #tpu.memory_space<vmem>>, vector<1x1x128xf32>
    %442 = vector.shape_cast %441 : vector<1x1x128xf32> to vector<1x128xf32>
    %443 = arith.mulf %440, %428 : vector<1x128xf32>
    %444 = arith.mulf %442, %435 : vector<1x128xf32>
    %445 = arith.subf %443, %444 : vector<1x128xf32>
    %446 = arith.mulf %442, %428 : vector<1x128xf32>
    %447 = arith.mulf %440, %435 : vector<1x128xf32>
    %448 = arith.addf %446, %447 : vector<1x128xf32>
    %c0_197 = arith.constant 0 : index
    %c27 = arith.constant 27 : index
    %c0_198 = arith.constant 0 : index
    %449 = vector.load %arg1[%c0_197, %c27, %c0_198] : memref<1x32x128xf32, #tpu.memory_space<vmem>>, vector<1x1x128xf32>
    %450 = vector.shape_cast %449 : vector<1x1x128xf32> to vector<1x128xf32>
    %c0_199 = arith.constant 0 : index
    %c27_200 = arith.constant 27 : index
    %c0_201 = arith.constant 0 : index
    %451 = vector.load %arg2[%c0_199, %c27_200, %c0_201] : memref<1x32x128xf32, #tpu.memory_space<vmem>>, vector<1x1x128xf32>
    %452 = vector.shape_cast %451 : vector<1x1x128xf32> to vector<1x128xf32>
    %453 = arith.mulf %450, %448 : vector<1x128xf32>
    %454 = arith.mulf %452, %438 : vector<1x128xf32>
    %455 = arith.subf %453, %454 : vector<1x128xf32>
    %456 = arith.mulf %452, %448 : vector<1x128xf32>
    %457 = arith.mulf %450, %438 : vector<1x128xf32>
    %458 = arith.addf %456, %457 : vector<1x128xf32>
    %459 = tpu.concatenate %245, %305, %355, %395, %425, %445, %455, %458 in 0 : vector<1x128xf32>, vector<1x128xf32>, vector<1x128xf32>, vector<1x128xf32>, vector<1x128xf32>, vector<1x128xf32>, vector<1x128xf32>, vector<1x128xf32> -> vector<8x128xf32>
    %c0_202 = arith.constant 0 : index
    %c0_203 = arith.constant 0 : index
    %c0_204 = arith.constant 0 : index
    %460 = vector.load %arg3[%c0_202, %c0_203, %c0_204] : memref<1x8x128xf32, #tpu.memory_space<vmem>>, vector<1x8x128xf32>
    %461 = vector.shape_cast %460 : vector<1x8x128xf32> to vector<8x128xf32>
    %462 = arith.mulf %461, %459 : vector<8x128xf32>
    %c0_205 = arith.constant 0 : index
    %c0_206 = arith.constant 0 : index
    %c0_207 = arith.constant 0 : index
    %463 = vector.load %arg4[%c0_205, %c0_206, %c0_207] : memref<1x8x128xf32, #tpu.memory_space<vmem>>, vector<1x8x128xf32>
    %464 = vector.shape_cast %463 : vector<1x8x128xf32> to vector<8x128xf32>
    %465 = vector.shape_cast %462 : vector<8x128xf32> to vector<1x8x128xf32>
    tpu.vector_store %arg4[%c0_205, %c0_206, %c0_207], %465 {strides = array<i32>} : memref<1x8x128xf32, #tpu.memory_space<vmem>>, vector<1x8x128xf32>,
    return
  }
  func.func @transform_0(%arg0: i32) -> (i32, i32, i32) {
    %c0_i32 = arith.constant 0 : i32
    %c0_i32_0 = arith.constant 0 : i32
    %c0_i32_1 = arith.constant 0 : i32
    return %arg0, %c0_i32, %c0_i32_0 : i32, i32, i32
  }
  func.func @transform_1(%arg0: i32) -> (i32, i32, i32) {
    %c0_i32 = arith.constant 0 : i32
    %c0_i32_0 = arith.constant 0 : i32
    %c0_i32_1 = arith.constant 0 : i32
    return %arg0, %c0_i32, %c0_i32_0 : i32, i32, i32
  }
  func.func @transform_2(%arg0: i32) -> (i32, i32, i32) {
    %c0_i32 = arith.constant 0 : i32
    %c0_i32_0 = arith.constant 0 : i32
    %c0_i32_1 = arith.constant 0 : i32
    return %arg0, %c0_i32, %c0_i32_0 : i32, i32, i32
  }
  func.func @transform_3(%arg0: i32) -> (i32, i32, i32) {
    %c0_i32 = arith.constant 0 : i32
    %c0_i32_0 = arith.constant 0 : i32
    %c0_i32_1 = arith.constant 0 : i32
    return %arg0, %c0_i32, %c0_i32_0 : i32, i32, i32
  }
}

</mosaic_0001>

<llo_original>
// kernel: _lambda_.1
$region0: #{_lambda_.1}
  #allocation0 [shape = 'u32[]', space=smem, size = 0x4, offset = 0x4, fixed_abs, tag = 'smem constant byte address 0x4 - core index']
  #allocation1 [shape = 'u32[144,128]{1,0:T(1,128)}', space=vmem, size = 0x12000, scoped, tag = 'internal scratch']
  %s0 = inlined_call_operand.vmem [shape: f32[1,32,128], index: 0, kind: input, shape index: {}]
  %s1 = inlined_call_operand.vmem [shape: f32[1,32,128], index: 1, kind: input, shape index: {}]
  %s2 = inlined_call_operand.vmem [shape: f32[1,8,128], index: 2, kind: input, shape index: {}]
  %s3 = inlined_call_operand.vmem [shape: f32[1,8,128], index: 3, kind: output, shape index: {}]
  %s4 = sld [smem:[#allocation0]]
  $region22: #{_lambda_.1} parent=0
    _
  %s6 = ssub.s32 1, %s4
  %s7 = scalar_select 0, %s6, %s4
  // Predicated region
  $region2: #{_lambda_.1} parent=0 // pred_check
    _
  $region3: #{_lambda_.1} parent=0 // pred_check_branch
    %9 = sbr.rel (0) target = $region5
  $region4: #{_lambda_.1} parent=0 // pred_region
    _
  $region5: #{_lambda_.1} parent=0 // pred_fallthru
    _
  // Predicated region
  $region6: #{_lambda_.1} parent=0 // pred_check
    _
  $region7: #{_lambda_.1} parent=0 // pred_check_branch
    %11 = sbr.rel (0) target = $region9
  $region8: #{_lambda_.1} parent=0 // pred_region
    _
  $region9: #{_lambda_.1} parent=0 // pred_fallthru
    _
  // Predicated region
  $region10: #{_lambda_.1} parent=0 // pred_check
    _
  $region11: #{_lambda_.1} parent=0 // pred_check_branch
    %13 = sbr.rel (0) target = $region13
  $region12: #{_lambda_.1} parent=0 // pred_region
    _
  $region13: #{_lambda_.1} parent=0 // pred_fallthru
    _
  %v14 = vlaneseq
  %v15 = vand.u32 %v14, 127
  %vm16 = vcmp.lt.s32.totalorder %v15, 128
  %vm17 = vcmp.lt.s32.totalorder %v15, 0
  %v18 = vsub.s32 0, %v15
  %v19 = vsel %vm17, %v18, %v15
  %v20 = vshrl.u32 %v19, 3
  %v21 = vand.u32 %v19, 7
  %v22 = vsub.s32 0, %v21
  %v23 = vsel %vm17, %v22, %v21
  %vm24 = vcmp.ne.s32.totalorder %v23, 0
  %vm25 = vcmp.lt.s32.totalorder %v23, 0
  %vm26 = vmand %vm25, %vm24
  %v27 = vadd.s32 %v23, 8
  %v28 = vsel %vm26, %v27, %v23
  %vm29 = vcmp.eq.s32.totalorder %v28, 0
  %vm30 = vmand %vm29, %vm16
  %v31 = vsel %vm30, 1.0, 0.0
  %vm32 = vcmp.eq.s32.totalorder %v28, 1
  %vm33 = vmand %vm32, %vm16
  %v34 = vsel %vm33, 1.0, 0.0
  %vm35 = vcmp.eq.s32.totalorder %v28, 2
  %vm36 = vmand %vm35, %vm16
  %v37 = vsel %vm36, 1.0, 0.0
  %vm38 = vcmp.eq.s32.totalorder %v28, 3
  %vm39 = vmand %vm38, %vm16
  %v40 = vsel %vm39, 1.0, 0.0
  %vm41 = vcmp.eq.s32.totalorder %v28, 4
  %vm42 = vmand %vm41, %vm16
  %v43 = vsel %vm42, 1.0, 0.0
  %vm44 = vcmp.eq.s32.totalorder %v28, 5
  %vm45 = vmand %vm44, %vm16
  %v46 = vsel %vm45, 1.0, 0.0
  %vm47 = vcmp.eq.s32.totalorder %v28, 6
  %vm48 = vmand %vm47, %vm16
  %v49 = vsel %vm48, 1.0, 0.0
  %vm50 = vcmp.eq.s32.totalorder %v28, 7
  %vm51 = vmand %vm50, %vm16
  %v52 = vsel %vm51, 1.0, 0.0
  %v53 = vld [vmem:[%s0] sm:$0x1]
  %v54 = vld [vmem:[%s1] sm:$0x1]
  %v55 = vmul.f32 %v53, %v49
  %v56 = vmul.f32 %v54, %v52
  %v57 = vsub.f32 %v55, %v56
  %v58 = vmul.f32 %v54, %v49
  %v59 = vmul.f32 %v53, %v52
  %v60 = vadd.f32 %v58, %v59
  %v61 = vld [vmem:[%s0 + $0x1] sm:$0x1]
  %v62 = vld [vmem:[%s1 + $0x1] sm:$0x1]
  %v63 = vmul.f32 %v61, %v46
  %v64 = vmul.f32 %v62, %v57
  %v65 = vsub.f32 %v63, %v64
  %v66 = vmul.f32 %v62, %v46
  %v67 = vmul.f32 %v61, %v57
  %v68 = vadd.f32 %v66, %v67
  %v69 = vld [vmem:[%s0 + $0x2] sm:$0x1]
  %v70 = vld [vmem:[%s1 + $0x2] sm:$0x1]
  %v71 = vmul.f32 %v69, %v43
  %v72 = vmul.f32 %v70, %v65
  %v73 = vsub.f32 %v71, %v72
  %v74 = vmul.f32 %v70, %v43
  %v75 = vmul.f32 %v69, %v65
  %v76 = vadd.f32 %v74, %v75
  %v77 = vld [vmem:[%s0 + $0x3] sm:$0x1]
  %v78 = vld [vmem:[%s1 + $0x3] sm:$0x1]
  %v79 = vmul.f32 %v77, %v40
  %v80 = vmul.f32 %v78, %v73
  %v81 = vsub.f32 %v79, %v80
  %v82 = vmul.f32 %v78, %v40
  %v83 = vmul.f32 %v77, %v73
  %v84 = vadd.f32 %v82, %v83
  %v85 = vld [vmem:[%s0 + $0x4] sm:$0x1]
  %v86 = vld [vmem:[%s1 + $0x4] sm:$0x1]
  %v87 = vmul.f32 %v85, %v37
  %v88 = vmul.f32 %v86, %v81
  %v89 = vsub.f32 %v87, %v88
  %v90 = vmul.f32 %v86, %v37
  %v91 = vmul.f32 %v85, %v81
  %v92 = vadd.f32 %v90, %v91
  %v93 = vld [vmem:[%s0 + $0x5] sm:$0x1]
  %v94 = vld [vmem:[%s1 + $0x5] sm:$0x1]
  %v95 = vmul.f32 %v93, %v34
  %v96 = vmul.f32 %v94, %v89
  %v97 = vsub.f32 %v95, %v96
  %v98 = vmul.f32 %v94, %v34
  %v99 = vmul.f32 %v93, %v89
  %v100 = vadd.f32 %v98, %v99
  %v101 = vld [vmem:[%s0 + $0x6] sm:$0x1]
  %v102 = vld [vmem:[%s1 + $0x6] sm:$0x1]
  %v103 = vmul.f32 %v101, %v31
  %v104 = vmul.f32 %v102, %v97
  %v105 = vsub.f32 %v103, %v104
  %v106 = vmul.f32 %v102, %v31
  %v107 = vmul.f32 %v101, %v97
  %v108 = vadd.f32 %v106, %v107
  %v109 = vld [vmem:[%s0 + $0x7] sm:$0x1]
  %v110 = vld [vmem:[%s1 + $0x7] sm:$0x1]
  %v111 = vmul.f32 %v109, %v68
  %v112 = vmul.f32 %v110, %v60
  %v113 = vsub.f32 %v111, %v112
  %v114 = vmul.f32 %v110, %v68
  %v115 = vmul.f32 %v109, %v60
  %v116 = vadd.f32 %v114, %v115
  %v117 = vld [vmem:[%s0 + $0x8] sm:$0x1]
  %v118 = vld [vmem:[%s1 + $0x8] sm:$0x1]
  %v119 = vmul.f32 %v117, %v76
  %v120 = vmul.f32 %v118, %v113
  %v121 = vsub.f32 %v119, %v120
  %v122 = vmul.f32 %v118, %v76
  %v123 = vmul.f32 %v117, %v113
  %v124 = vadd.f32 %v122, %v123
  %v125 = vld [vmem:[%s0 + $0x9] sm:$0x1]
  %v126 = vld [vmem:[%s1 + $0x9] sm:$0x1]
  %v127 = vmul.f32 %v125, %v84
  %v128 = vmul.f32 %v126, %v121
  %v129 = vsub.f32 %v127, %v128
  %v130 = vmul.f32 %v126, %v84
  %v131 = vmul.f32 %v125, %v121
  %v132 = vadd.f32 %v130, %v131
  %v133 = vld [vmem:[%s0 + $0xa] sm:$0x1]
  %v134 = vld [vmem:[%s1 + $0xa] sm:$0x1]
  %v135 = vmul.f32 %v133, %v92
  %v136 = vmul.f32 %v134, %v129
  %v137 = vsub.f32 %v135, %v136
  %v138 = vmul.f32 %v134, %v92
  %v139 = vmul.f32 %v133, %v129
  %v140 = vadd.f32 %v138, %v139
  %v141 = vld [vmem:[%s0 + $0xb] sm:$0x1]
  %v142 = vld [vmem:[%s1 + $0xb] sm:$0x1]
  %v143 = vmul.f32 %v141, %v100
  %v144 = vmul.f32 %v142, %v137
  %v145 = vsub.f32 %v143, %v144
  %v146 = vmul.f32 %v142, %v100
  %v147 = vmul.f32 %v141, %v137
  %v148 = vadd.f32 %v146, %v147
  %v149 = vld [vmem:[%s0 + $0xc] sm:$0x1]
  %v150 = vld [vmem:[%s1 + $0xc] sm:$0x1]
  %v151 = vmul.f32 %v149, %v108
  %v152 = vmul.f32 %v150, %v145
  %v153 = vsub.f32 %v151, %v152
  %v154 = vmul.f32 %v150, %v108
  %v155 = vmul.f32 %v149, %v145
  %v156 = vadd.f32 %v154, %v155
  %v157 = vld [vmem:[%s0 + $0xd] sm:$0x1]
  %v158 = vld [vmem:[%s1 + $0xd] sm:$0x1]
  %v159 = vmul.f32 %v157, %v124
  %v160 = vmul.f32 %v158, %v116
  %v161 = vsub.f32 %v159, %v160
  %v162 = vmul.f32 %v158, %v124
  %v163 = vmul.f32 %v157, %v116
  %v164 = vadd.f32 %v162, %v163
  %v165 = vld [vmem:[%s0 + $0xe] sm:$0x1]
  %v166 = vld [vmem:[%s1 + $0xe] sm:$0x1]
  %v167 = vmul.f32 %v165, %v132
  %v168 = vmul.f32 %v166, %v161
  %v169 = vsub.f32 %v167, %v168
  %v170 = vmul.f32 %v166, %v132
  %v171 = vmul.f32 %v165, %v161
  %v172 = vadd.f32 %v170, %v171
  %v173 = vld [vmem:[%s0 + $0xf] sm:$0x1]
  %v174 = vld [vmem:[%s1 + $0xf] sm:$0x1]
  %v175 = vmul.f32 %v173, %v140
  %v176 = vmul.f32 %v174, %v169
  %v177 = vsub.f32 %v175, %v176
  %v178 = vmul.f32 %v174, %v140
  %v179 = vmul.f32 %v173, %v169
  %v180 = vadd.f32 %v178, %v179
  %v181 = vld [vmem:[%s0 + $0x10] sm:$0x1]
  %v182 = vld [vmem:[%s1 + $0x10] sm:$0x1]
  %v183 = vmul.f32 %v181, %v148
  %v184 = vmul.f32 %v182, %v177
  %v185 = vsub.f32 %v183, %v184
  %v186 = vmul.f32 %v182, %v148
  %v187 = vmul.f32 %v181, %v177
  %v188 = vadd.f32 %v186, %v187
  %v189 = vld [vmem:[%s0 + $0x11] sm:$0x1]
  %v190 = vld [vmem:[%s1 + $0x11] sm:$0x1]
  %v191 = vmul.f32 %v189, %v156
  %v192 = vmul.f32 %v190, %v185
  %v193 = vsub.f32 %v191, %v192
  %v194 = vmul.f32 %v190, %v156
  %v195 = vmul.f32 %v189, %v185
  %v196 = vadd.f32 %v194, %v195
  %v197 = vld [vmem:[%s0 + $0x12] sm:$0x1]
  %v198 = vld [vmem:[%s1 + $0x12] sm:$0x1]
  %v199 = vmul.f32 %v197, %v172
  %v200 = vmul.f32 %v198, %v164
  %v201 = vsub.f32 %v199, %v200
  %v202 = vmul.f32 %v198, %v172
  %v203 = vmul.f32 %v197, %v164
  %v204 = vadd.f32 %v202, %v203
  %v205 = vld [vmem:[%s0 + $0x13] sm:$0x1]
  %v206 = vld [vmem:[%s1 + $0x13] sm:$0x1]
  %v207 = vmul.f32 %v205, %v180
  %v208 = vmul.f32 %v206, %v201
  %v209 = vsub.f32 %v207, %v208
  %v210 = vmul.f32 %v206, %v180
  %v211 = vmul.f32 %v205, %v201
  %v212 = vadd.f32 %v210, %v211
  %v213 = vld [vmem:[%s0 + $0x14] sm:$0x1]
  %v214 = vld [vmem:[%s1 + $0x14] sm:$0x1]
  %v215 = vmul.f32 %v213, %v188
  %v216 = vmul.f32 %v214, %v209
  %v217 = vsub.f32 %v215, %v216
  %v218 = vmul.f32 %v214, %v188
  %v219 = vmul.f32 %v213, %v209
  %v220 = vadd.f32 %v218, %v219
  %v221 = vld [vmem:[%s0 + $0x15] sm:$0x1]
  %v222 = vld [vmem:[%s1 + $0x15] sm:$0x1]
  %v223 = vmul.f32 %v221, %v196
  %v224 = vmul.f32 %v222, %v217
  %v225 = vsub.f32 %v223, %v224
  %v226 = vmul.f32 %v222, %v196
  %v227 = vmul.f32 %v221, %v217
  %v228 = vadd.f32 %v226, %v227
  %v229 = vld [vmem:[%s0 + $0x16] sm:$0x1]
  %v230 = vld [vmem:[%s1 + $0x16] sm:$0x1]
  %v231 = vmul.f32 %v229, %v212
  %v232 = vmul.f32 %v230, %v204
  %v233 = vsub.f32 %v231, %v232
  %v234 = vmul.f32 %v230, %v212
  %v235 = vmul.f32 %v229, %v204
  %v236 = vadd.f32 %v234, %v235
  %v237 = vld [vmem:[%s0 + $0x17] sm:$0x1]
  %v238 = vld [vmem:[%s1 + $0x17] sm:$0x1]
  %v239 = vmul.f32 %v237, %v220
  %v240 = vmul.f32 %v238, %v233
  %v241 = vsub.f32 %v239, %v240
  %v242 = vmul.f32 %v238, %v220
  %v243 = vmul.f32 %v237, %v233
  %v244 = vadd.f32 %v242, %v243
  %v245 = vld [vmem:[%s0 + $0x18] sm:$0x1]
  %v246 = vld [vmem:[%s1 + $0x18] sm:$0x1]
  %v247 = vmul.f32 %v245, %v228
  %v248 = vmul.f32 %v246, %v241
  %v249 = vsub.f32 %v247, %v248
  %v250 = vmul.f32 %v246, %v228
  %v251 = vmul.f32 %v245, %v241
  %v252 = vadd.f32 %v250, %v251
  %v253 = vld [vmem:[%s0 + $0x19] sm:$0x1]
  %v254 = vld [vmem:[%s1 + $0x19] sm:$0x1]
  %v255 = vmul.f32 %v253, %v244
  %v256 = vmul.f32 %v254, %v236
  %v257 = vsub.f32 %v255, %v256
  %v258 = vmul.f32 %v254, %v244
  %v259 = vmul.f32 %v253, %v236
  %v260 = vadd.f32 %v258, %v259
  %v261 = vld [vmem:[%s0 + $0x1a] sm:$0x1]
  %v262 = vld [vmem:[%s1 + $0x1a] sm:$0x1]
  %v263 = vmul.f32 %v261, %v252
  %v264 = vmul.f32 %v262, %v257
  %v265 = vsub.f32 %v263, %v264
  %v266 = vmul.f32 %v262, %v252
  %v267 = vmul.f32 %v261, %v257
  %v268 = vadd.f32 %v266, %v267
  %v269 = vld [vmem:[%s0 + $0x1b] sm:$0x1]
  %v270 = vld [vmem:[%s1 + $0x1b] sm:$0x1]
  %v271 = vmul.f32 %v269, %v268
  %v272 = vmul.f32 %v270, %v260
  %v273 = vsub.f32 %v271, %v272
  %v274 = vmul.f32 %v270, %v268
  %v275 = vmul.f32 %v269, %v260
  %v276 = vadd.f32 %v274, %v275
  %v278 = vrot.slane %v153, 7
  %v281 = vrot.slane %v193, 6
  %v284 = vrot.slane %v225, 5
  %v287 = vrot.slane %v249, 4
  %v290 = vrot.slane %v265, 3
  %v293 = vrot.slane %v273, 2
  %v296 = vrot.slane %v276, 1
  %vm298 = vcmask 1040384
  %v299 = vsel %vm298, %v105, %v278
  %vm300 = vcmask 1041408
  %v301 = vsel %vm300, %v299, %v281
  %vm302 = vcmask 1042432
  %v303 = vsel %vm302, %v301, %v284
  %vm304 = vcmask 1043456
  %v305 = vsel %vm304, %v303, %v287
  %vm306 = vcmask 1044480
  %v307 = vsel %vm306, %v305, %v290
  %vm308 = vcmask 1045504
  %v309 = vsel %vm308, %v307, %v293
  %vm310 = vcmask 1046528
  %v311 = vsel %vm310, %v309, %v296
  %v312 = vld [vmem:[%s2] sm:$0xff]
  %v313 = vmul.f32 %v312, %v311
  %314 = vst [vmem:[%s3] sm:$0xff] %v313
  // Predicated region
  $region14: #{_lambda_.1} parent=0 // pred_check
    _
  $region15: #{_lambda_.1} parent=0 // pred_check_branch
    %316 = sbr.rel (0) target = $region17
  $region16: #{_lambda_.1} parent=0 // pred_region
    _
  $region17: #{_lambda_.1} parent=0 // pred_fallthru
    _
  // Predicated region
  $region18: #{_lambda_.1} parent=0 // pred_check
    _
  $region19: #{_lambda_.1} parent=0 // pred_check_branch
    %318 = sbr.rel (0) target = $region21
  $region20: #{_lambda_.1} parent=0 // pred_region
    _
  $region21: #{_lambda_.1} parent=0 // pred_fallthru
    _

</llo_original>
